<compile_context>
chip_gen: v5e
topology: v5e:2x2
jax: 0.10.0
libtpu: 0.0.40
codegen_flags: <defaults>
</compile_context>

<pallas_src>
import functools

import jax
import jax.numpy as jnp
from jax import lax
from jax.experimental import pallas as pl
from jax.experimental.pallas import tpu as pltpu


def _round_up(a, b):
    return (a + b - 1) // b * b


def _cdiv(a, b):
    return -(-a // b)


def _vmem_capacity_bytes():
    """Per-core VMEM capacity in bytes; conservative fallback if unqueryable."""
    try:
        cap = int(getattr(pltpu.get_tpu_info(), "vmem_capacity_bytes", 0))
        if cap > 0:
            return cap
    except Exception:
        pass
    return 64 << 20  # v7x per-TensorCore capacity; safe lower bound elsewhere.


def sae_kernel(k, method, compute_dtype, write_hid,
               x_ref, w_enc_ref, w_dec_ref, aux_ref, pre_bias_ref,
               x_hat_ref, *hid_refs):
    aux = aux_ref[...]                                  # (2, dm) f32
    b_dec = aux[0:1, :]                                 # (1, dm)
    pthru = aux[1:2, :]                                 # (1, dm)

    x = x_ref[...]                                      # (TN, dm), input dtype

    # ---- encoder: pre = x @ W_enc + (-(b_dec @ W_enc)), f32 accumulation ----
    pre = jnp.dot(x.astype(compute_dtype), w_enc_ref[...],
                  preferred_element_type=jnp.float32) + pre_bias_ref[...]

    # ---- top-k threshold along the feature axis ----
    if method == "peel":
        # Small k: peel the row max k-1 times (XLU row-max + VPU select per
        # pass). NOTE: ties at the running max are all removed in one pass, so
        # on exactly-tied data the threshold can sit below the true k-th value
        # ("at least k" semantics); fine for continuous activations.
        neg = jnp.finfo(jnp.float32).min
        work = pre
        for _ in range(k - 1):
            m = jnp.max(work, axis=-1, keepdims=True)   # (TN, 1)   XLU
            work = jnp.where(work >= m, neg, work)      # VPU
        kth = jnp.max(work, axis=-1, keepdims=True)     # (TN, 1)
        keep = pre >= kth
    else:
        # Production k: exact k-th-largest per row via a 32-step bitwise
        # threshold search on the order-preserving int32 key of the f32 bit
        # pattern.  Fixed pass count (independent of k), each pass is one VPU
        # compare + one XLU row-sum and no full-width writeback of `work`.
        bits = pltpu.bitcast(pre, jnp.int32)
        key = jnp.where(bits >= 0, bits, bits ^ jnp.int32(0x7FFFFFFF))
        sign = jnp.int32(-(1 << 31))
        u_t = jnp.zeros((pre.shape[0], 1), jnp.int32)   # threshold (offset-bin)
        kf = jnp.float32(k)
        for b in range(31, -1, -1):
            bit = 1 << b
            bit_i32 = bit - (1 << 32) if bit >= (1 << 31) else bit
            cand = u_t | jnp.int32(bit_i32)
            t_signed = cand ^ sign                      # back to signed key dom
            cnt = jnp.sum((key >= t_signed).astype(jnp.float32),
                          axis=-1, keepdims=True)
            u_t = jnp.where(cnt >= kf, cand, u_t)
        keep = key >= (u_t ^ sign)

    x_hid = jnp.where(keep, pre, 0.0)                   # (TN, df) f32
    if write_hid:
        hid_refs[0][...] = x_hid.astype(hid_refs[0].dtype)

    # ---- decoder + bias + passthrough residual (f32) ----
    dec = jnp.dot(x_hid.astype(compute_dtype), w_dec_ref[...],
                  preferred_element_type=jnp.float32)   # (TN, dm) f32
    x_hat_ref[...] = (dec + b_dec + pthru * x.astype(jnp.float32)
                      ).astype(x_hat_ref.dtype)


def sae_forward(x, w_enc, w_dec, b_dec, passthrough, *, k, tile_n=None,
                compute_dtype=jnp.bfloat16, hid_dtype=None, return_hid=True,
                topk_method="auto"):
    """x: (..., d_model). Returns (x_hat, x_hid) or x_hat if return_hid=False."""
    orig_shape = x.shape
    d_model = x.shape[-1]
    d_features = w_enc.shape[1]
    assert w_enc.shape == (d_model, d_features)
    assert w_dec.shape == (d_features, d_model)
    assert 1 <= k <= d_features
    assert topk_method in ("auto", "peel", "search")
    method = topk_method
    if method == "auto":
        method = "peel" if k <= 8 else "search"
    hid_dtype = x.dtype if hid_dtype is None else jnp.dtype(hid_dtype)

    # ---- lane-dense padding of the model/feature axes (multiples of 128) ----
    d_model_p = _round_up(d_model, 128)
    d_feat_p = _round_up(d_features, 128)
    pm, pf = d_model_p - d_model, d_feat_p - d_features

    w_enc_p = jnp.pad(w_enc.astype(compute_dtype), ((0, pm), (0, pf)))
    w_dec_p = jnp.pad(w_dec.astype(compute_dtype), ((0, pf), (0, pm)))

    b_dec_f = b_dec.reshape(d_model).astype(jnp.float32)
    pthru_f = passthrough.reshape(d_model).astype(jnp.float32)
    aux = jnp.stack([jnp.pad(b_dec_f, (0, pm)),
                     jnp.pad(pthru_f, (0, pm))], axis=0)          # (2, dm_p) f32

    # Fold the decoder bias into the encoder: pre_bias = -(b_dec @ W_enc),
    # computed once in f32; padded feature columns get f32.min so the top-k
    # never selects them.
    pre_bias_core = -(b_dec_f @ w_enc.astype(jnp.float32))        # (df,)
    if pf:
        pre_bias_core = jnp.concatenate(
            [pre_bias_core,
             jnp.full((pf,), jnp.finfo(jnp.float32).min, jnp.float32)])
    pre_bias = pre_bias_core.reshape(1, d_feat_p)

    xf = x.reshape(-1, d_model)
    n = xf.shape[0]

    # ---- token tile sized to the device's real VMEM capacity ----
    cap = _vmem_capacity_bytes()
    cb = jnp.dtype(compute_dtype).itemsize
    xb = jnp.dtype(x.dtype).itemsize
    hb = jnp.dtype(hid_dtype).itemsize
    weight_bytes = 2 * d_model_p * d_feat_p * cb                  # resident, 1x
    fixed_bytes = weight_bytes + 2 * (2 * d_model_p + d_feat_p) * 4 + (2 << 20)
    per_row = (2 * d_model_p * xb                                 # x in (2 buf)
               + 2 * d_model_p * xb                               # x_hat (2 buf)
               + (2 * d_feat_p * hb if return_hid else 0)         # x_hid (2 buf)
               + 5 * d_feat_p * 4)                                # f32/i32 temps
    budget = cap - (6 << 20) - fixed_bytes
    tn_cap = max(8, (budget // per_row) // 8 * 8) if budget > per_row * 8 else 8
    # TODO(synk): when the resident weights alone exceed VMEM (production SAE
    # widths on v7x), add a d_features grid axis with an f32 decoder
    # accumulator (pl.when init/finalize) and a two-pass top-k threshold.
    tn_req = 512 if tile_n is None else int(tile_n)
    tn = min(tn_req, tn_cap, _round_up(n, 8))
    tn = max(8, (tn // 8) * 8)

    # v7x has two TensorCores: prefer an even number of parallel tiles.
    grid_n = _cdiv(n, tn)
    if grid_n > 1 and grid_n % 2 == 1 and tn > 8:
        tn_half = max(8, _round_up(tn // 2, 8))
        if _cdiv(n, tn_half) % 2 == 0:
            tn = tn_half
    n_pad = _round_up(n, tn)
    grid_n = n_pad // tn

    xf = jnp.pad(xf, ((0, n_pad - n), (0, pm)))

    vmem_limit = int(min(max(fixed_bytes + tn * per_row + (8 << 20), 32 << 20),
                         cap - (4 << 20)))

    flops = 4 * n_pad * d_model_p * d_feat_p                      # two matmuls
    bytes_accessed = int(n_pad * d_model_p * xb + weight_bytes
                         + 2 * (2 * d_model_p + d_feat_p) * 4
                         + n_pad * d_model_p * xb
                         + (n_pad * d_feat_p * hb if return_hid else 0))

    kernel = functools.partial(sae_kernel, k, method, compute_dtype, return_hid)

    def _run(single_buffer_weights):
        if single_buffer_weights:
            def w_spec(shape):
                return pl.BlockSpec(shape, lambda i: (0, 0),
                                    pipeline_mode=pl.Buffered(1))
        else:
            def w_spec(shape):
                return pl.BlockSpec(shape, lambda i: (0, 0))
        in_specs = [
            pl.BlockSpec((tn, d_model_p), lambda i: (i, 0)),      # x rows
            w_spec((d_model_p, d_feat_p)),                        # W_enc resident
            w_spec((d_feat_p, d_model_p)),                        # W_dec resident
            pl.BlockSpec((2, d_model_p), lambda i: (0, 0)),       # b_dec/passthru
            pl.BlockSpec((1, d_feat_p), lambda i: (0, 0)),        # pre_bias
        ]
        out_shape = [jax.ShapeDtypeStruct((n_pad, d_model_p), x.dtype)]
        out_specs = [pl.BlockSpec((tn, d_model_p), lambda i: (i, 0))]
        if return_hid:
            out_shape.append(jax.ShapeDtypeStruct((n_pad, d_feat_p), hid_dtype))
            out_specs.append(pl.BlockSpec((tn, d_feat_p), lambda i: (i, 0)))
        return pl.pallas_call(
            kernel,
            out_shape=tuple(out_shape),
            grid_spec=pltpu.PrefetchScalarGridSpec(
                num_scalar_prefetch=0,
                grid=(grid_n,),
                in_specs=in_specs,
                out_specs=out_specs,
            ),
            compiler_params=pltpu.CompilerParams(
                dimension_semantics=("parallel",),
                vmem_limit_bytes=vmem_limit),
            cost_estimate=pl.CostEstimate(flops=flops, transcendentals=0,
                                          bytes_accessed=bytes_accessed),
        )(xf, w_enc_p, w_dec_p, aux, pre_bias)

    try:
        res = _run(True)
    except Exception:
        # Fallback for Pallas versions without BlockSpec pipeline_mode support.
        res = _run(False)

    x_hat = res[0][:n, :d_model].reshape(orig_shape)
    if not return_hid:
        return x_hat
    x_hid = res[1][:n, :d_features].reshape(*orig_shape[:-1], d_features)
    return x_hat, x_hid


def sae_reference(x, w_enc, w_dec, b_dec, passthrough, *, k,
                  compute_dtype=jnp.float32):
    """Pure-JAX reference following the same compute-dtype path as the kernel."""
    xf = x.astype(jnp.float32)
    xc = (xf - b_dec.astype(jnp.float32)).astype(compute_dtype)
    pre = jnp.dot(xc, w_enc.astype(compute_dtype),
                  preferred_element_type=jnp.float32)
    kth = lax.top_k(pre, k)[0][..., -1:]
    x_hid = jnp.where(pre >= kth, pre, 0.0)
    x_hat = (jnp.dot(x_hid.astype(compute_dtype), w_dec.astype(compute_dtype),
                     preferred_element_type=jnp.float32)
             + b_dec.astype(jnp.float32)
             + passthrough.astype(jnp.float32) * xf)
    return x_hat.astype(x.dtype), x_hid.astype(x.dtype)


if __name__ == "__main__":
    # SAEConfig-equivalent small shapes: d_model=32, expansion=4 -> d_features=128
    batch, n_ctx, d_model, expansion = 2, 8, 32, 4
    d_features = expansion * d_model

    key = jax.random.PRNGKey(0)
    kx, kw = jax.random.split(key)

    # Parameter init mirroring SAE.__init__: w_dec.weight (d_model, d_features)
    # with unit-norm columns (dim=-2), w_enc.weight = w_dec.weight.T, b_dec = 0.
    wd = jax.random.normal(kw, (d_model, d_features), jnp.float32)
    wd = wd / jnp.linalg.norm(wd, axis=-2, keepdims=True)
    w_enc = wd                       # math layout (d_model, d_features)
    w_dec = wd.T                     # math layout (d_features, d_model)
    b_dec = jnp.zeros((d_model,), jnp.float32)
    # config.passthrough = [0, 3] -> boolean mask over d_model, used as float.
    passthrough = jnp.zeros((d_model,), jnp.float32).at[jnp.array([0, 3])].set(1.0)

    x = jax.random.normal(kx, (batch, n_ctx, d_model), jnp.float32)

    # 1) Small k (peel path), bf16 MXU compute with f32 accumulation.
    k_small = 5
    x_hat, x_hid = sae_forward(x, w_enc, w_dec, b_dec, passthrough, k=k_small)
    jax.block_until_ready((x_hat, x_hid))
    ref_hat, ref_hid = sae_reference(x, w_enc, w_dec, b_dec, passthrough,
                                     k=k_small, compute_dtype=jnp.bfloat16)
    assert x_hat.shape == x.shape
    assert x_hid.shape == (batch, n_ctx, d_features)
    assert jnp.allclose(x_hat, ref_hat, atol=1e-3, rtol=1e-3)
    assert jnp.allclose(x_hid, ref_hid, atol=1e-3, rtol=1e-3)
    assert int((x_hid != 0).sum(-1).max()) <= k_small

    # 2) Production-style k (config default k=30) -> bitwise threshold search.
    k_big = 30
    x_hat2, x_hid2 = sae_forward(x, w_enc, w_dec, b_dec, passthrough, k=k_big)
    jax.block_until_ready((x_hat2, x_hid2))
    ref_hat2, ref_hid2 = sae_reference(x, w_enc, w_dec, b_dec, passthrough,
                                       k=k_big, compute_dtype=jnp.bfloat16)
    assert jnp.allclose(x_hat2, ref_hat2, atol=1e-3, rtol=1e-3)
    assert jnp.allclose(x_hid2, ref_hid2, atol=1e-3, rtol=1e-3)
    assert int((x_hid2 != 0).sum(-1).max()) <= k_big

    # 3) Peel vs search self-consistency on the f32 compute path (both compute
    #    the exact k-th-largest threshold, so results must agree).
    a_hat, a_hid = sae_forward(x, w_enc, w_dec, b_dec, passthrough, k=k_small,
                               compute_dtype=jnp.float32, topk_method="peel")
    b_hat, b_hid = sae_forward(x, w_enc, w_dec, b_dec, passthrough, k=k_small,
                               compute_dtype=jnp.float32, topk_method="search")
    jax.block_until_ready((a_hat, a_hid, b_hat, b_hid))
    assert jnp.allclose(a_hat, b_hat)
    assert jnp.allclose(a_hid, b_hid)
    assert int((a_hid != 0).sum(-1).max()) <= k_small

    # 4) x_hat-only fast path (skips the dense x_hid HBM writeback).
    x_hat_only = sae_forward(x, w_enc, w_dec, b_dec, passthrough, k=k_small,
                             return_hid=False)
    jax.block_until_ready(x_hat_only)
    assert jnp.allclose(x_hat_only, x_hat)

    print("KERNEL_OK")
</pallas_src>

<mosaic_0001>
module attributes {stable_mosaic.version = 11 : i64} {
  func.func @sae_kernel(%arg0: i32, %arg1: memref<16x128xf32, #tpu.memory_space<vmem>>, %arg2: memref<128x128xbf16, #tpu.memory_space<vmem>>, %arg3: memref<128x128xbf16, #tpu.memory_space<vmem>>, %arg4: memref<2x128xf32, #tpu.memory_space<vmem>>, %arg5: memref<1x128xf32, #tpu.memory_space<vmem>>, %arg6: memref<16x128xf32, #tpu.memory_space<vmem>>, %arg7: memref<16x128xf32, #tpu.memory_space<vmem>>) attributes {dimension_semantics = [#tpu.dimension_semantics<parallel>], iteration_bounds = array<i64: 1>, scalar_prefetch = 0 : i64, scratch_operands = 0 : i64, tpu.core_type = #tpu.core_type<tc>, window_params = [{transform_indices = @transform_0, window_bounds = array<i64: 16, 128>}, {pipeline_mode = #tpu.pipeline_mode<synchronous>, transform_indices = @transform_1, window_bounds = array<i64: 128, 128>}, {pipeline_mode = #tpu.pipeline_mode<synchronous>, transform_indices = @transform_2, window_bounds = array<i64: 128, 128>}, {pipeline_mode = #tpu.pipeline_mode<synchronous>, transform_indices = @transform_3, window_bounds = array<i64: 2, 128>}, {pipeline_mode = #tpu.pipeline_mode<synchronous>, transform_indices = @transform_4, window_bounds = array<i64: 1, 128>}, {transform_indices = @transform_5, window_bounds = array<i64: 16, 128>}, {transform_indices = @transform_6, window_bounds = array<i64: 16, 128>}]} {
    %c0 = arith.constant 0 : index
    %c0_0 = arith.constant 0 : index
    %0 = vector.load %arg4[%c0, %c0_0] : memref<2x128xf32, #tpu.memory_space<vmem>>, vector<2x128xf32>
    %1 = vector.extract_strided_slice %0 {offsets = [0, 0], sizes = [1, 128], strides = [1, 1]} : vector<2x128xf32> to vector<1x128xf32>
    %2 = vector.extract_strided_slice %0 {offsets = [1, 0], sizes = [1, 128], strides = [1, 1]} : vector<2x128xf32> to vector<1x128xf32>
    %c0_1 = arith.constant 0 : index
    %c0_2 = arith.constant 0 : index
    %3 = vector.load %arg1[%c0_1, %c0_2] : memref<16x128xf32, #tpu.memory_space<vmem>>, vector<16x128xf32>
    %4 = arith.truncf %3 : vector<16x128xf32> to vector<16x128xbf16>
    %c0_3 = arith.constant 0 : index
    %c0_4 = arith.constant 0 : index
    %5 = vector.load %arg2[%c0_3, %c0_4] : memref<128x128xbf16, #tpu.memory_space<vmem>>, vector<128x128xbf16>
    %cst = arith.constant dense<0.000000e+00> : vector<16x128xf32>
    %6 = tpu.matmul %4, %5, %cst {dimension_numbers = #tpu.dot_dimension_numbers<[1], [0], [0], [1], [0, 0, 1, 1], [], []>} : vector<16x128xbf16>, vector<128x128xbf16>, vector<16x128xf32> -> vector<16x128xf32>
    %c0_5 = arith.constant 0 : index
    %c0_6 = arith.constant 0 : index
    %7 = vector.load %arg5[%c0_5, %c0_6] : memref<1x128xf32, #tpu.memory_space<vmem>>, vector<1x128xf32>
    %8 = vector.broadcast %7 : vector<1x128xf32> to vector<16x128xf32>
    %9 = arith.addf %6, %8 : vector<16x128xf32>
    %cst_7 = arith.constant dense<0xFF800000> : vector<16xf32>
    %10 = vector.multi_reduction <maximumf>, %9, %cst_7 [1] : vector<16x128xf32> to vector<16xf32>
    %11 = vector.shape_cast %10 : vector<16xf32> to vector<16x1xf32>
    %12 = vector.broadcast %11 : vector<16x1xf32> to vector<16x128xf32>
    %13 = arith.cmpf oge, %9, %12 : vector<16x128xf32>
    %cst_8 = arith.constant -3.40282347E+38 : f32
    %14 = vector.broadcast %cst_8 : f32 to vector<16x128xf32>
    %15 = arith.select %13, %14, %9 : vector<16x128xi1>, vector<16x128xf32>
    %cst_9 = arith.constant dense<0xFF800000> : vector<16xf32>
    %16 = vector.multi_reduction <maximumf>, %15, %cst_9 [1] : vector<16x128xf32> to vector<16xf32>
    %17 = vector.shape_cast %16 : vector<16xf32> to vector<16x1xf32>
    %18 = vector.broadcast %17 : vector<16x1xf32> to vector<16x128xf32>
    %19 = arith.cmpf oge, %15, %18 : vector<16x128xf32>
    %cst_10 = arith.constant -3.40282347E+38 : f32
    %20 = vector.broadcast %cst_10 : f32 to vector<16x128xf32>
    %21 = arith.select %19, %20, %15 : vector<16x128xi1>, vector<16x128xf32>
    %cst_11 = arith.constant dense<0xFF800000> : vector<16xf32>
    %22 = vector.multi_reduction <maximumf>, %21, %cst_11 [1] : vector<16x128xf32> to vector<16xf32>
    %23 = vector.shape_cast %22 : vector<16xf32> to vector<16x1xf32>
    %24 = vector.broadcast %23 : vector<16x1xf32> to vector<16x128xf32>
    %25 = arith.cmpf oge, %21, %24 : vector<16x128xf32>
    %cst_12 = arith.constant -3.40282347E+38 : f32
    %26 = vector.broadcast %cst_12 : f32 to vector<16x128xf32>
    %27 = arith.select %25, %26, %21 : vector<16x128xi1>, vector<16x128xf32>
    %cst_13 = arith.constant dense<0xFF800000> : vector<16xf32>
    %28 = vector.multi_reduction <maximumf>, %27, %cst_13 [1] : vector<16x128xf32> to vector<16xf32>
    %29 = vector.shape_cast %28 : vector<16xf32> to vector<16x1xf32>
    %30 = vector.broadcast %29 : vector<16x1xf32> to vector<16x128xf32>
    %31 = arith.cmpf oge, %27, %30 : vector<16x128xf32>
    %cst_14 = arith.constant -3.40282347E+38 : f32
    %32 = vector.broadcast %cst_14 : f32 to vector<16x128xf32>
    %33 = arith.select %31, %32, %27 : vector<16x128xi1>, vector<16x128xf32>
    %cst_15 = arith.constant dense<0xFF800000> : vector<16xf32>
    %34 = vector.multi_reduction <maximumf>, %33, %cst_15 [1] : vector<16x128xf32> to vector<16xf32>
    %35 = vector.shape_cast %34 : vector<16xf32> to vector<16x1xf32>
    %36 = vector.broadcast %35 : vector<16x1xf32> to vector<16x128xf32>
    %37 = arith.cmpf oge, %9, %36 : vector<16x128xf32>
    %cst_16 = arith.constant 0.000000e+00 : f32
    %38 = vector.broadcast %cst_16 : f32 to vector<16x128xf32>
    %39 = arith.select %37, %9, %38 : vector<16x128xi1>, vector<16x128xf32>
    %c0_17 = arith.constant 0 : index
    %c0_18 = arith.constant 0 : index
    %40 = vector.load %arg7[%c0_17, %c0_18] : memref<16x128xf32, #tpu.memory_space<vmem>>, vector<16x128xf32>
    tpu.vector_store %arg7[%c0_17, %c0_18], %39 {strides = array<i32>} : memref<16x128xf32, #tpu.memory_space<vmem>>, vector<16x128xf32>,
    %41 = arith.truncf %39 : vector<16x128xf32> to vector<16x128xbf16>
    %c0_19 = arith.constant 0 : index
    %c0_20 = arith.constant 0 : index
    %42 = vector.load %arg3[%c0_19, %c0_20] : memref<128x128xbf16, #tpu.memory_space<vmem>>, vector<128x128xbf16>
    %cst_21 = arith.constant dense<0.000000e+00> : vector<16x128xf32>
    %43 = tpu.matmul %41, %42, %cst_21 {dimension_numbers = #tpu.dot_dimension_numbers<[1], [0], [0], [1], [0, 0, 1, 1], [], []>} : vector<16x128xbf16>, vector<128x128xbf16>, vector<16x128xf32> -> vector<16x128xf32>
    %44 = vector.broadcast %1 : vector<1x128xf32> to vector<16x128xf32>
    %45 = arith.addf %43, %44 : vector<16x128xf32>
    %46 = vector.broadcast %2 : vector<1x128xf32> to vector<16x128xf32>
    %47 = arith.mulf %46, %3 : vector<16x128xf32>
    %48 = arith.addf %45, %47 : vector<16x128xf32>
    %c0_22 = arith.constant 0 : index
    %c0_23 = arith.constant 0 : index
    %49 = vector.load %arg6[%c0_22, %c0_23] : memref<16x128xf32, #tpu.memory_space<vmem>>, vector<16x128xf32>
    tpu.vector_store %arg6[%c0_22, %c0_23], %48 {strides = array<i32>} : memref<16x128xf32, #tpu.memory_space<vmem>>, vector<16x128xf32>,
    return
  }
  func.func @transform_0(%arg0: i32) -> (i32, i32) {
    %c0_i32 = arith.constant 0 : i32
    %c0_i32_0 = arith.constant 0 : i32
    return %arg0, %c0_i32 : i32, i32
  }
  func.func @transform_1(%arg0: i32) -> (i32, i32) {
    %c0_i32 = arith.constant 0 : i32
    %c0_i32_0 = arith.constant 0 : i32
    %c0_i32_1 = arith.constant 0 : i32
    return %c0_i32, %c0_i32_0 : i32, i32
  }
  func.func @transform_2(%arg0: i32) -> (i32, i32) {
    %c0_i32 = arith.constant 0 : i32
    %c0_i32_0 = arith.constant 0 : i32
    %c0_i32_1 = arith.constant 0 : i32
    return %c0_i32, %c0_i32_0 : i32, i32
  }
  func.func @transform_3(%arg0: i32) -> (i32, i32) {
    %c0_i32 = arith.constant 0 : i32
    %c0_i32_0 = arith.constant 0 : i32
    %c0_i32_1 = arith.constant 0 : i32
    return %c0_i32, %c0_i32_0 : i32, i32
  }
  func.func @transform_4(%arg0: i32) -> (i32, i32) {
    %c0_i32 = arith.constant 0 : i32
    %c0_i32_0 = arith.constant 0 : i32
    %c0_i32_1 = arith.constant 0 : i32
    return %c0_i32, %c0_i32_0 : i32, i32
  }
  func.func @transform_5(%arg0: i32) -> (i32, i32) {
    %c0_i32 = arith.constant 0 : i32
    %c0_i32_0 = arith.constant 0 : i32
    return %arg0, %c0_i32 : i32, i32
  }
  func.func @transform_6(%arg0: i32) -> (i32, i32) {
    %c0_i32 = arith.constant 0 : i32
    %c0_i32_0 = arith.constant 0 : i32
    return %arg0, %c0_i32 : i32, i32
  }
}

module attributes {stable_mosaic.version = 11 : i64} {
  func.func @sae_kernel(%arg0: i32, %arg1: memref<16x128xf32, #tpu.memory_space<vmem>>, %arg2: memref<128x128xbf16, #tpu.memory_space<vmem>>, %arg3: memref<128x128xbf16, #tpu.memory_space<vmem>>, %arg4: memref<2x128xf32, #tpu.memory_space<vmem>>, %arg5: memref<1x128xf32, #tpu.memory_space<vmem>>, %arg6: memref<16x128xf32, #tpu.memory_space<vmem>>, %arg7: memref<16x128xf32, #tpu.memory_space<vmem>>) attributes {dimension_semantics = [#tpu.dimension_semantics<parallel>], iteration_bounds = array<i64: 1>, scalar_prefetch = 0 : i64, scratch_operands = 0 : i64, tpu.core_type = #tpu.core_type<tc>, window_params = [{transform_indices = @transform_0, window_bounds = array<i64: 16, 128>}, {pipeline_mode = #tpu.pipeline_mode<synchronous>, transform_indices = @transform_1, window_bounds = array<i64: 128, 128>}, {pipeline_mode = #tpu.pipeline_mode<synchronous>, transform_indices = @transform_2, window_bounds = array<i64: 128, 128>}, {pipeline_mode = #tpu.pipeline_mode<synchronous>, transform_indices = @transform_3, window_bounds = array<i64: 2, 128>}, {pipeline_mode = #tpu.pipeline_mode<synchronous>, transform_indices = @transform_4, window_bounds = array<i64: 1, 128>}, {transform_indices = @transform_5, window_bounds = array<i64: 16, 128>}, {transform_indices = @transform_6, window_bounds = array<i64: 16, 128>}]} {
    %c0 = arith.constant 0 : index
    %c0_0 = arith.constant 0 : index
    %0 = vector.load %arg4[%c0, %c0_0] : memref<2x128xf32, #tpu.memory_space<vmem>>, vector<2x128xf32>
    %1 = vector.extract_strided_slice %0 {offsets = [0, 0], sizes = [1, 128], strides = [1, 1]} : vector<2x128xf32> to vector<1x128xf32>
    %2 = vector.extract_strided_slice %0 {offsets = [1, 0], sizes = [1, 128], strides = [1, 1]} : vector<2x128xf32> to vector<1x128xf32>
    %c0_1 = arith.constant 0 : index
    %c0_2 = arith.constant 0 : index
    %3 = vector.load %arg1[%c0_1, %c0_2] : memref<16x128xf32, #tpu.memory_space<vmem>>, vector<16x128xf32>
    %4 = arith.truncf %3 : vector<16x128xf32> to vector<16x128xbf16>
    %c0_3 = arith.constant 0 : index
    %c0_4 = arith.constant 0 : index
    %5 = vector.load %arg2[%c0_3, %c0_4] : memref<128x128xbf16, #tpu.memory_space<vmem>>, vector<128x128xbf16>
    %cst = arith.constant dense<0.000000e+00> : vector<16x128xf32>
    %6 = tpu.matmul %4, %5, %cst {dimension_numbers = #tpu.dot_dimension_numbers<[1], [0], [0], [1], [0, 0, 1, 1], [], []>} : vector<16x128xbf16>, vector<128x128xbf16>, vector<16x128xf32> -> vector<16x128xf32>
    %c0_5 = arith.constant 0 : index
    %c0_6 = arith.constant 0 : index
    %7 = vector.load %arg5[%c0_5, %c0_6] : memref<1x128xf32, #tpu.memory_space<vmem>>, vector<1x128xf32>
    %8 = vector.broadcast %7 : vector<1x128xf32> to vector<16x128xf32>
    %9 = arith.addf %6, %8 : vector<16x128xf32>
    %cst_7 = arith.constant dense<0xFF800000> : vector<16xf32>
    %10 = vector.multi_reduction <maximumf>, %9, %cst_7 [1] : vector<16x128xf32> to vector<16xf32>
    %11 = vector.shape_cast %10 : vector<16xf32> to vector<16x1xf32>
    %12 = vector.broadcast %11 : vector<16x1xf32> to vector<16x128xf32>
    %13 = arith.cmpf oge, %9, %12 : vector<16x128xf32>
    %cst_8 = arith.constant -3.40282347E+38 : f32
    %14 = vector.broadcast %cst_8 : f32 to vector<16x128xf32>
    %15 = arith.select %13, %14, %9 : vector<16x128xi1>, vector<16x128xf32>
    %cst_9 = arith.constant dense<0xFF800000> : vector<16xf32>
    %16 = vector.multi_reduction <maximumf>, %15, %cst_9 [1] : vector<16x128xf32> to vector<16xf32>
    %17 = vector.shape_cast %16 : vector<16xf32> to vector<16x1xf32>
    %18 = vector.broadcast %17 : vector<16x1xf32> to vector<16x128xf32>
    %19 = arith.cmpf oge, %15, %18 : vector<16x128xf32>
    %cst_10 = arith.constant -3.40282347E+38 : f32
    %20 = vector.broadcast %cst_10 : f32 to vector<16x128xf32>
    %21 = arith.select %19, %20, %15 : vector<16x128xi1>, vector<16x128xf32>
    %cst_11 = arith.constant dense<0xFF800000> : vector<16xf32>
    %22 = vector.multi_reduction <maximumf>, %21, %cst_11 [1] : vector<16x128xf32> to vector<16xf32>
    %23 = vector.shape_cast %22 : vector<16xf32> to vector<16x1xf32>
    %24 = vector.broadcast %23 : vector<16x1xf32> to vector<16x128xf32>
    %25 = arith.cmpf oge, %21, %24 : vector<16x128xf32>
    %cst_12 = arith.constant -3.40282347E+38 : f32
    %26 = vector.broadcast %cst_12 : f32 to vector<16x128xf32>
    %27 = arith.select %25, %26, %21 : vector<16x128xi1>, vector<16x128xf32>
    %cst_13 = arith.constant dense<0xFF800000> : vector<16xf32>
    %28 = vector.multi_reduction <maximumf>, %27, %cst_13 [1] : vector<16x128xf32> to vector<16xf32>
    %29 = vector.shape_cast %28 : vector<16xf32> to vector<16x1xf32>
    %30 = vector.broadcast %29 : vector<16x1xf32> to vector<16x128xf32>
    %31 = arith.cmpf oge, %27, %30 : vector<16x128xf32>
    %cst_14 = arith.constant -3.40282347E+38 : f32
    %32 = vector.broadcast %cst_14 : f32 to vector<16x128xf32>
    %33 = arith.select %31, %32, %27 : vector<16x128xi1>, vector<16x128xf32>
    %cst_15 = arith.constant dense<0xFF800000> : vector<16xf32>
    %34 = vector.multi_reduction <maximumf>, %33, %cst_15 [1] : vector<16x128xf32> to vector<16xf32>
    %35 = vector.shape_cast %34 : vector<16xf32> to vector<16x1xf32>
    %36 = vector.broadcast %35 : vector<16x1xf32> to vector<16x128xf32>
    %37 = arith.cmpf oge, %9, %36 : vector<16x128xf32>
    %cst_16 = arith.constant 0.000000e+00 : f32
    %38 = vector.broadcast %cst_16 : f32 to vector<16x128xf32>
    %39 = arith.select %37, %9, %38 : vector<16x128xi1>, vector<16x128xf32>
    %c0_17 = arith.constant 0 : index
    %c0_18 = arith.constant 0 : index
    %40 = vector.load %arg7[%c0_17, %c0_18] : memref<16x128xf32, #tpu.memory_space<vmem>>, vector<16x128xf32>
    tpu.vector_store %arg7[%c0_17, %c0_18], %39 {strides = array<i32>} : memref<16x128xf32, #tpu.memory_space<vmem>>, vector<16x128xf32>,
    %41 = arith.truncf %39 : vector<16x128xf32> to vector<16x128xbf16>
    %c0_19 = arith.constant 0 : index
    %c0_20 = arith.constant 0 : index
    %42 = vector.load %arg3[%c0_19, %c0_20] : memref<128x128xbf16, #tpu.memory_space<vmem>>, vector<128x128xbf16>
    %cst_21 = arith.constant dense<0.000000e+00> : vector<16x128xf32>
    %43 = tpu.matmul %41, %42, %cst_21 {dimension_numbers = #tpu.dot_dimension_numbers<[1], [0], [0], [1], [0, 0, 1, 1], [], []>} : vector<16x128xbf16>, vector<128x128xbf16>, vector<16x128xf32> -> vector<16x128xf32>
    %44 = vector.broadcast %1 : vector<1x128xf32> to vector<16x128xf32>
    %45 = arith.addf %43, %44 : vector<16x128xf32>
    %46 = vector.broadcast %2 : vector<1x128xf32> to vector<16x128xf32>
    %47 = arith.mulf %46, %3 : vector<16x128xf32>
    %48 = arith.addf %45, %47 : vector<16x128xf32>
    %c0_22 = arith.constant 0 : index
    %c0_23 = arith.constant 0 : index
    %49 = vector.load %arg6[%c0_22, %c0_23] : memref<16x128xf32, #tpu.memory_space<vmem>>, vector<16x128xf32>
    tpu.vector_store %arg6[%c0_22, %c0_23], %48 {strides = array<i32>} : memref<16x128xf32, #tpu.memory_space<vmem>>, vector<16x128xf32>,
    return
  }
  func.func @transform_0(%arg0: i32) -> (i32, i32) {
    %c0_i32 = arith.constant 0 : i32
    %c0_i32_0 = arith.constant 0 : i32
    return %arg0, %c0_i32 : i32, i32
  }
  func.func @transform_1(%arg0: i32) -> (i32, i32) {
    %c0_i32 = arith.constant 0 : i32
    %c0_i32_0 = arith.constant 0 : i32
    %c0_i32_1 = arith.constant 0 : i32
    return %c0_i32, %c0_i32_0 : i32, i32
  }
  func.func @transform_2(%arg0: i32) -> (i32, i32) {
    %c0_i32 = arith.constant 0 : i32
    %c0_i32_0 = arith.constant 0 : i32
    %c0_i32_1 = arith.constant 0 : i32
    return %c0_i32, %c0_i32_0 : i32, i32
  }
  func.func @transform_3(%arg0: i32) -> (i32, i32) {
    %c0_i32 = arith.constant 0 : i32
    %c0_i32_0 = arith.constant 0 : i32
    %c0_i32_1 = arith.constant 0 : i32
    return %c0_i32, %c0_i32_0 : i32, i32
  }
  func.func @transform_4(%arg0: i32) -> (i32, i32) {
    %c0_i32 = arith.constant 0 : i32
    %c0_i32_0 = arith.constant 0 : i32
    %c0_i32_1 = arith.constant 0 : i32
    return %c0_i32, %c0_i32_0 : i32, i32
  }
  func.func @transform_5(%arg0: i32) -> (i32, i32) {
    %c0_i32 = arith.constant 0 : i32
    %c0_i32_0 = arith.constant 0 : i32
    return %arg0, %c0_i32 : i32, i32
  }
  func.func @transform_6(%arg0: i32) -> (i32, i32) {
    %c0_i32 = arith.constant 0 : i32
    %c0_i32_0 = arith.constant 0 : i32
    return %arg0, %c0_i32 : i32, i32
  }
}

</mosaic_0001>

<llo_original>
// kernel: tpu_custom_call.1
$region0: #{tpu_custom_call.1}
  #allocation0 [shape = 'u32[]', space=smem, size = 0x4, offset = 0x4, fixed_abs, tag = 'smem constant byte address 0x4 - core index']
  #allocation1 [shape = 'u32[72,128]{1,0:T(1,128)}', space=vmem, size = 0x9000, scoped, tag = 'internal scratch']
  %s0 = inlined_call_operand.hbm [shape: f32[16,128], index: 0, kind: input, shape index: {}]
  %s1 = inlined_call_operand.hbm [shape: bf16[128,128], index: 1, kind: input, shape index: {}]
  %s2 = inlined_call_operand.hbm [shape: bf16[128,128], index: 2, kind: input, shape index: {}]
  %s3 = inlined_call_operand.vmem [shape: f32[2,128], index: 3, kind: input, shape index: {}]
  %s4 = inlined_call_operand.vmem [shape: f32[1,128], index: 4, kind: input, shape index: {}]
  %s5 = inlined_call_operand.hbm [shape: f32[16,128], index: 5, kind: output, shape index: {0}]
  %s6 = inlined_call_operand.hbm [shape: f32[16,128], index: 6, kind: output, shape index: {1}]
  %7 = xla_tuple %s5, %s6
  %s8 = sld [smem:[#allocation0]]
  $region50: #{tpu_custom_call.1} parent=0
    _
  %s10 = ssub.s32 1, %s8
  %s11 = scalar_select 0, %s10, %s8
  $region1: #{tpu_custom_call.1} parent=0
    #allocation2 [shape = 'u8[8192]{0}', space=vmem, size = 0x2000, scoped, tag = 'input window, operand 0, single buffered']
    #allocation3 [shape = 's32[1]{0}', space=sflag, size = 0x4, scoped, tag = 'scoped memory for tpu_custom_call.1']
    #allocation4 [shape = 's32[1]{0}', space=sflag, size = 0x4, scoped, tag = 'scoped memory for tpu_custom_call.1']
    #allocation5 [shape = 'u8[32768]{0}', space=vmem, size = 0x8000, scoped, tag = 'input window, operand 1, single buffered']
    #allocation6 [shape = 's32[1]{0}', space=sflag, size = 0x4, scoped, tag = 'scoped memory for tpu_custom_call.1']
    #allocation7 [shape = 'u8[32768]{0}', space=vmem, size = 0x8000, scoped, tag = 'input window, operand 2, single buffered']
    #allocation8 [shape = 'u8[8192]{0}', space=vmem, size = 0x2000, scoped, tag = 'output window, operand 0, single buffered']
    #allocation9 [shape = 'u8[8192]{0}', space=vmem, size = 0x2000, scoped, tag = 'output window, operand 1, single buffered']
    #allocation10 [shape = 's32[1]{0}', space=sflag, size = 0x4, scoped, tag = 'scoped memory for tpu_custom_call.1']
    %12 = vsyncpa [#allocation3], 0
    %13 = vsyncpa [#allocation6], 0
    %14 = vsyncpa [#allocation4], 0
    %15 = vsyncpa [#allocation10], 0
    // Predicated region
    $region2: #{tpu_custom_call.1} parent=1 // pred_check
      _
    $region3: #{tpu_custom_call.1} parent=1 // pred_check_branch
      %17 = sbr.rel (0) target = $region5
    $region4: #{tpu_custom_call.1} parent=1 // pred_region
      %19 = vsyncadd [#allocation3], 0
      %s20 = sshll.u32 %s0, 4
      %s21 = int_to_ptr.hbm [resolvable:$true] %s20
      %s22 = sshll.u32 [#allocation2], 4
      %s23 = int_to_ptr.vmem [resolvable:$true] %s22
      %28 = dma.hbm_to_vmem [thread:$0]  %s21, 256, %s23, [#allocation3], 128, 128, 8
    $region5: #{tpu_custom_call.1} parent=1 // pred_fallthru
      _
    // Predicated region
    $region6: #{tpu_custom_call.1} parent=1 // pred_check
      _
    $region7: #{tpu_custom_call.1} parent=1 // pred_check_branch
      %30 = sbr.rel (0) target = $region9
    $region8: #{tpu_custom_call.1} parent=1 // pred_region
      %32 = vsyncadd [#allocation6], 0
      %s33 = sshll.u32 %s1, 4
      %s34 = int_to_ptr.hbm [resolvable:$true] %s33
      %s35 = sshll.u32 [#allocation5], 4
      %s36 = int_to_ptr.vmem [resolvable:$true] %s35
      %41 = dma.hbm_to_vmem [thread:$0]  %s34, 1024, %s36, [#allocation6], 64, 64, 4
    $region9: #{tpu_custom_call.1} parent=1 // pred_fallthru
      _
    // Predicated region
    $region10: #{tpu_custom_call.1} parent=1 // pred_check
      _
    $region11: #{tpu_custom_call.1} parent=1 // pred_check_branch
      %43 = sbr.rel (0) target = $region13
    $region12: #{tpu_custom_call.1} parent=1 // pred_region
      %45 = vsyncadd [#allocation6], 0
      %s46 = sshll.u32 %s2, 4
      %s47 = int_to_ptr.hbm [resolvable:$true] %s46
      %s48 = sshll.u32 [#allocation7], 4
      %s49 = int_to_ptr.vmem [resolvable:$true] %s48
      %54 = dma.hbm_to_vmem [thread:$0]  %s47, 1024, %s49, [#allocation6], 64, 64, 4
    $region13: #{tpu_custom_call.1} parent=1 // pred_fallthru
      _
    // Predicated region
    $region14: #{tpu_custom_call.1} parent=1 // pred_check
      _
    $region15: #{tpu_custom_call.1} parent=1 // pred_check_branch
      %56 = sbr.rel (0) target = $region17
    $region16: #{tpu_custom_call.1} parent=1 // pred_region
      _
    $region17: #{tpu_custom_call.1} parent=1 // pred_fallthru
      _
    // Predicated region
    $region18: #{tpu_custom_call.1} parent=1 // pred_check
      _
    $region19: #{tpu_custom_call.1} parent=1 // pred_check_branch
      %58 = sbr.rel (0) target = $region21
    $region20: #{tpu_custom_call.1} parent=1 // pred_region
      _
    $region21: #{tpu_custom_call.1} parent=1 // pred_fallthru
      _
    // Predicated region
    $region22: #{tpu_custom_call.1} parent=1 // pred_check
      _
    $region23: #{tpu_custom_call.1} parent=1 // pred_check_branch
      %60 = sbr.rel (0) target = $region25
    $region24: #{tpu_custom_call.1} parent=1 // pred_region
      %62 = dma.done [#allocation3], 256
    $region25: #{tpu_custom_call.1} parent=1 // pred_fallthru
      _
    // Predicated region
    $region26: #{tpu_custom_call.1} parent=1 // pred_check
      _
    $region27: #{tpu_custom_call.1} parent=1 // pred_check_branch
      %64 = sbr.rel (0) target = $region29
    $region28: #{tpu_custom_call.1} parent=1 // pred_region
      %66 = dma.done [#allocation6], 1024
    $region29: #{tpu_custom_call.1} parent=1 // pred_fallthru
      _
    // Predicated region
    $region30: #{tpu_custom_call.1} parent=1 // pred_check
      _
    $region31: #{tpu_custom_call.1} parent=1 // pred_check_branch
      %68 = sbr.rel (0) target = $region33
    $region32: #{tpu_custom_call.1} parent=1 // pred_region
      %70 = dma.done [#allocation6], 1024
    $region33: #{tpu_custom_call.1} parent=1 // pred_fallthru
      _
    %v71 = vld [vmem:[%s3] sm:$0x3]
    %v72 = vld [vmem:[#allocation2] sm:$0xff]
    %v73 = vld [vmem:[#allocation2 + $0x8] sm:$0xff]
    %v74 = vpack.c.bf16 %v73, %v72
    %v75 = vld [vmem:[#allocation5] sm:$0xf]
    %v76 = vld [vmem:[#allocation5 + $0x4] sm:$0xf]
    %v77 = vld [vmem:[#allocation5 + $0x8] sm:$0xf]
    %v78 = vld [vmem:[#allocation5 + $0xc] sm:$0xf]
    %v79 = vld [vmem:[#allocation5 + $0x10] sm:$0xf]
    %v80 = vld [vmem:[#allocation5 + $0x14] sm:$0xf]
    %v81 = vld [vmem:[#allocation5 + $0x18] sm:$0xf]
    %v82 = vld [vmem:[#allocation5 + $0x1c] sm:$0xf]
    %v83 = vld [vmem:[#allocation5 + $0x20] sm:$0xf]
    %v84 = vld [vmem:[#allocation5 + $0x24] sm:$0xf]
    %v85 = vld [vmem:[#allocation5 + $0x28] sm:$0xf]
    %v86 = vld [vmem:[#allocation5 + $0x2c] sm:$0xf]
    %v87 = vld [vmem:[#allocation5 + $0x30] sm:$0xf]
    %v88 = vld [vmem:[#allocation5 + $0x34] sm:$0xf]
    %v89 = vld [vmem:[#allocation5 + $0x38] sm:$0xf]
    %v90 = vld [vmem:[#allocation5 + $0x3c] sm:$0xf]
    %v91 = vld [vmem:[%s4] sm:$0x1]
    %v93 = vperm.slane %v91, 0
    %v111 = vunpack.c.l.b16 %v75
    %v112 = vunpack.c.l.b16 %v76
    %v113 = vunpack.c.l.b16 %v77
    %v114 = vunpack.c.l.b16 %v78
    %v115 = vunpack.c.l.b16 %v79
    %v116 = vunpack.c.l.b16 %v80
    %v117 = vunpack.c.l.b16 %v81
    %v118 = vunpack.c.l.b16 %v82
    %v119 = vunpack.c.l.b16 %v83
    %v120 = vunpack.c.l.b16 %v84
    %v121 = vunpack.c.l.b16 %v85
    %v122 = vunpack.c.l.b16 %v86
    %v123 = vunpack.c.l.b16 %v87
    %v124 = vunpack.c.l.b16 %v88
    %v125 = vunpack.c.l.b16 %v89
    %v126 = vunpack.c.l.b16 %v90
    %v127 = vpack.c.b16 %v112, %v111
    %v128 = vpack.c.b16 %v114, %v113
    %v129 = vpack.c.b16 %v116, %v115
    %v130 = vpack.c.b16 %v118, %v117
    %v131 = vpack.c.b16 %v120, %v119
    %v132 = vpack.c.b16 %v122, %v121
    %v133 = vpack.c.b16 %v124, %v123
    %v134 = vpack.c.b16 %v126, %v125
    %143 = vmatpush.bf16.msra.mxu0 %v134
    %144 = vmatpush.bf16.msra.mxu0 %v133
    %145 = vmatpush.bf16.msra.mxu0 %v132
    %146 = vmatpush.bf16.msra.mxu0 %v131
    %147 = vmatpush.bf16.msra.mxu0 %v130
    %148 = vmatpush.bf16.msra.mxu0 %v129
    %149 = vmatpush.bf16.msra.mxu0 %v128
    %150 = vmatpush.bf16.msra.mxu0 %v127
    %151 = vmatmul.bf16.gmra.mxu0 %v74
    %v152 = vpop.f32.mrf.mxu0
    %v153 = vadd.f32 %v93, %v152
    %v154 = vpop.f32.mrf.mxu0
    %v155 = vadd.f32 %v93, %v154
    %156 = vdwg.mxu0
    %157 = vmax.xlane.f32.xlu0 %v153
    %v158 = vpop.xlane.xlu0 %157
    %159 = vmax.xlane.f32.xlu0 %v155
    %v160 = vpop.xlane.xlu0 %159
    %vm161 = vcmp.ge.f32.partialorder %v153, %v158
    %vm162 = vcmp.ge.f32.partialorder %v155, %v160
    %v163 = vsel %vm161, -3.4028235e+38, %v153
    %v164 = vsel %vm162, -3.4028235e+38, %v155
    %165 = vmax.xlane.f32.xlu0 %v163
    %v166 = vpop.xlane.xlu0 %165
    %167 = vmax.xlane.f32.xlu0 %v164
    %v168 = vpop.xlane.xlu0 %167
    %vm169 = vcmp.ge.f32.partialorder %v163, %v166
    %vm170 = vcmp.ge.f32.partialorder %v164, %v168
    %v171 = vsel %vm169, -3.4028235e+38, %v163
    %v172 = vsel %vm170, -3.4028235e+38, %v164
    %173 = vmax.xlane.f32.xlu0 %v171
    %v174 = vpop.xlane.xlu0 %173
    %175 = vmax.xlane.f32.xlu0 %v172
    %v176 = vpop.xlane.xlu0 %175
    %vm177 = vcmp.ge.f32.partialorder %v171, %v174
    %vm178 = vcmp.ge.f32.partialorder %v172, %v176
    %v179 = vsel %vm177, -3.4028235e+38, %v171
    %v180 = vsel %vm178, -3.4028235e+38, %v172
    %181 = vmax.xlane.f32.xlu0 %v179
    %v182 = vpop.xlane.xlu0 %181
    %183 = vmax.xlane.f32.xlu0 %v180
    %v184 = vpop.xlane.xlu0 %183
    %vm185 = vcmp.ge.f32.partialorder %v179, %v182
    %vm186 = vcmp.ge.f32.partialorder %v180, %v184
    %v187 = vsel %vm185, -3.4028235e+38, %v179
    %v188 = vsel %vm186, -3.4028235e+38, %v180
    %189 = vmax.xlane.f32.xlu0 %v187
    %v190 = vpop.xlane.xlu0 %189
    %191 = vmax.xlane.f32.xlu0 %v188
    %v192 = vpop.xlane.xlu0 %191
    %vm193 = vcmp.ge.f32.partialorder %v153, %v190
    %vm194 = vcmp.ge.f32.partialorder %v155, %v192
    %v195 = vsel %vm193, %v153, 0.0
    %v196 = vsel %vm194, %v155, 0.0
    %197 = vst [vmem:[#allocation9] sm:$0xff] %v195
    %198 = vst [vmem:[#allocation9 + $0x8] sm:$0xff] %v196
    %v199 = vpack.c.bf16 %v196, %v195
    %v200 = vld [vmem:[#allocation7] sm:$0xf]
    %v201 = vld [vmem:[#allocation7 + $0x4] sm:$0xf]
    %v202 = vld [vmem:[#allocation7 + $0x8] sm:$0xf]
    %v203 = vld [vmem:[#allocation7 + $0xc] sm:$0xf]
    %v204 = vld [vmem:[#allocation7 + $0x10] sm:$0xf]
    %v205 = vld [vmem:[#allocation7 + $0x14] sm:$0xf]
    %v206 = vld [vmem:[#allocation7 + $0x18] sm:$0xf]
    %v207 = vld [vmem:[#allocation7 + $0x1c] sm:$0xf]
    %v208 = vld [vmem:[#allocation7 + $0x20] sm:$0xf]
    %v209 = vld [vmem:[#allocation7 + $0x24] sm:$0xf]
    %v210 = vld [vmem:[#allocation7 + $0x28] sm:$0xf]
    %v211 = vld [vmem:[#allocation7 + $0x2c] sm:$0xf]
    %v212 = vld [vmem:[#allocation7 + $0x30] sm:$0xf]
    %v213 = vld [vmem:[#allocation7 + $0x34] sm:$0xf]
    %v214 = vld [vmem:[#allocation7 + $0x38] sm:$0xf]
    %v215 = vld [vmem:[#allocation7 + $0x3c] sm:$0xf]
    %v216 = vperm.slane %v71, 0
    %v233 = vunpack.c.l.b16 %v200
    %v234 = vunpack.c.l.b16 %v201
    %v235 = vunpack.c.l.b16 %v202
    %v236 = vunpack.c.l.b16 %v203
    %v237 = vunpack.c.l.b16 %v204
    %v238 = vunpack.c.l.b16 %v205
    %v239 = vunpack.c.l.b16 %v206
    %v240 = vunpack.c.l.b16 %v207
    %v241 = vunpack.c.l.b16 %v208
    %v242 = vunpack.c.l.b16 %v209
    %v243 = vunpack.c.l.b16 %v210
    %v244 = vunpack.c.l.b16 %v211
    %v245 = vunpack.c.l.b16 %v212
    %v246 = vunpack.c.l.b16 %v213
    %v247 = vunpack.c.l.b16 %v214
    %v248 = vunpack.c.l.b16 %v215
    %v249 = vpack.c.b16 %v234, %v233
    %v250 = vpack.c.b16 %v236, %v235
    %v251 = vpack.c.b16 %v238, %v237
    %v252 = vpack.c.b16 %v240, %v239
    %v253 = vpack.c.b16 %v242, %v241
    %v254 = vpack.c.b16 %v244, %v243
    %v255 = vpack.c.b16 %v246, %v245
    %v256 = vpack.c.b16 %v248, %v247
    %265 = vmatpush.bf16.msra.mxu0 %v256
    %266 = vmatpush.bf16.msra.mxu0 %v255
    %267 = vmatpush.bf16.msra.mxu0 %v254
    %268 = vmatpush.bf16.msra.mxu0 %v253
    %269 = vmatpush.bf16.msra.mxu0 %v252
    %270 = vmatpush.bf16.msra.mxu0 %v251
    %271 = vmatpush.bf16.msra.mxu0 %v250
    %272 = vmatpush.bf16.msra.mxu0 %v249
    %273 = vmatmul.bf16.gmra.mxu0 %v199
    %v274 = vpop.f32.mrf.mxu0
    %v275 = vadd.f32 %v216, %v274
    %v276 = vpop.f32.mrf.mxu0
    %v277 = vadd.f32 %v216, %v276
    %278 = vdwg.mxu0
    %v279 = vperm.slane %v71, 1
    %v280 = vmul.f32 %v279, %v72
    %v281 = vmul.f32 %v279, %v73
    %v282 = vadd.f32 %v275, %v280
    %v283 = vadd.f32 %v277, %v281
    %284 = vst [vmem:[#allocation8] sm:$0xff] %v282
    %285 = vst [vmem:[#allocation8 + $0x8] sm:$0xff] %v283
    // Predicated region
    $region34: #{tpu_custom_call.1} parent=1 // pred_check
      _
    $region35: #{tpu_custom_call.1} parent=1 // pred_check_branch
      %287 = sbr.rel (0) target = $region37
    $region36: #{tpu_custom_call.1} parent=1 // pred_region
      %289 = vsyncadd [#allocation4], 0
      %s290 = sshll.u32 [#allocation8], 4
      %s291 = int_to_ptr.vmem [resolvable:$true] %s290
      %s292 = sshll.u32 %s5, 4
      %s293 = int_to_ptr.hbm [resolvable:$true] %s292
      %298 = dma.vmem_to_hbm [thread:$0]  %s291, 256, %s293, [#allocation4], 128, 128, 8
    $region37: #{tpu_custom_call.1} parent=1 // pred_fallthru
      _
    // Predicated region
    $region38: #{tpu_custom_call.1} parent=1 // pred_check
      _
    $region39: #{tpu_custom_call.1} parent=1 // pred_check_branch
      %300 = sbr.rel (0) target = $region41
    $region40: #{tpu_custom_call.1} parent=1 // pred_region
      %302 = vsyncadd [#allocation10], 0
      %s303 = sshll.u32 [#allocation9], 4
      %s304 = int_to_ptr.vmem [resolvable:$true] %s303
      %s305 = sshll.u32 %s6, 4
      %s306 = int_to_ptr.hbm [resolvable:$true] %s305
      %311 = dma.vmem_to_hbm [thread:$0]  %s304, 256, %s306, [#allocation10], 128, 128, 8
    $region41: #{tpu_custom_call.1} parent=1 // pred_fallthru
      _
    // Predicated region
    $region42: #{tpu_custom_call.1} parent=1 // pred_check
      _
    $region43: #{tpu_custom_call.1} parent=1 // pred_check_branch
      %313 = sbr.rel (0) target = $region45
    $region44: #{tpu_custom_call.1} parent=1 // pred_region
      %315 = dma.done [#allocation4], 256
    $region45: #{tpu_custom_call.1} parent=1 // pred_fallthru
      _
    // Predicated region
    $region46: #{tpu_custom_call.1} parent=1 // pred_check
      _
    $region47: #{tpu_custom_call.1} parent=1 // pred_check_branch
      %317 = sbr.rel (0) target = $region49
    $region48: #{tpu_custom_call.1} parent=1 // pred_region
      %319 = dma.done [#allocation10], 256
    $region49: #{tpu_custom_call.1} parent=1 // pred_fallthru
      _
    %320 = vsyncpa [#allocation3], 1
    %321 = vsyncpa [#allocation6], 1
    %322 = vsyncpa [#allocation4], 1
    %323 = vsyncpa [#allocation10], 1

// kernel: tpu_custom_call.1
$region0: #{tpu_custom_call.1}
  #allocation0 [shape = 'u32[]', space=smem, size = 0x4, offset = 0x4, fixed_abs, tag = 'smem constant byte address 0x4 - core index']
  #allocation1 [shape = 'u32[72,128]{1,0:T(1,128)}', space=vmem, size = 0x9000, scoped, tag = 'internal scratch']
  %s0 = inlined_call_operand.hbm [shape: f32[16,128], index: 0, kind: input, shape index: {}]
  %s1 = inlined_call_operand.hbm [shape: bf16[128,128], index: 1, kind: input, shape index: {}]
  %s2 = inlined_call_operand.hbm [shape: bf16[128,128], index: 2, kind: input, shape index: {}]
  %s3 = inlined_call_operand.vmem [shape: f32[2,128], index: 3, kind: input, shape index: {}]
  %s4 = inlined_call_operand.vmem [shape: f32[1,128], index: 4, kind: input, shape index: {}]
  %s5 = inlined_call_operand.hbm [shape: f32[16,128], index: 5, kind: output, shape index: {0}]
  %s6 = inlined_call_operand.hbm [shape: f32[16,128], index: 6, kind: output, shape index: {1}]
  %7 = xla_tuple %s5, %s6
  %s8 = sld [smem:[#allocation0]]
  $region50: #{tpu_custom_call.1} parent=0
    _
  %s10 = ssub.s32 1, %s8
  %s11 = scalar_select 0, %s10, %s8
  $region1: #{tpu_custom_call.1} parent=0
    #allocation2 [shape = 'u8[8192]{0}', space=vmem, size = 0x2000, scoped, tag = 'input window, operand 0, single buffered']
    #allocation3 [shape = 's32[1]{0}', space=sflag, size = 0x4, scoped, tag = 'scoped memory for tpu_custom_call.1']
    #allocation4 [shape = 's32[1]{0}', space=sflag, size = 0x4, scoped, tag = 'scoped memory for tpu_custom_call.1']
    #allocation5 [shape = 'u8[32768]{0}', space=vmem, size = 0x8000, scoped, tag = 'input window, operand 1, single buffered']
    #allocation6 [shape = 's32[1]{0}', space=sflag, size = 0x4, scoped, tag = 'scoped memory for tpu_custom_call.1']
    #allocation7 [shape = 'u8[32768]{0}', space=vmem, size = 0x8000, scoped, tag = 'input window, operand 2, single buffered']
    #allocation8 [shape = 'u8[8192]{0}', space=vmem, size = 0x2000, scoped, tag = 'output window, operand 0, single buffered']
    #allocation9 [shape = 'u8[8192]{0}', space=vmem, size = 0x2000, scoped, tag = 'output window, operand 1, single buffered']
    #allocation10 [shape = 's32[1]{0}', space=sflag, size = 0x4, scoped, tag = 'scoped memory for tpu_custom_call.1']
    %12 = vsyncpa [#allocation3], 0
    %13 = vsyncpa [#allocation6], 0
    %14 = vsyncpa [#allocation4], 0
    %15 = vsyncpa [#allocation10], 0
    // Predicated region
    $region2: #{tpu_custom_call.1} parent=1 // pred_check
      _
    $region3: #{tpu_custom_call.1} parent=1 // pred_check_branch
      %17 = sbr.rel (0) target = $region5
    $region4: #{tpu_custom_call.1} parent=1 // pred_region
      %19 = vsyncadd [#allocation3], 0
      %s20 = sshll.u32 %s0, 4
      %s21 = int_to_ptr.hbm [resolvable:$true] %s20
      %s22 = sshll.u32 [#allocation2], 4
      %s23 = int_to_ptr.vmem [resolvable:$true] %s22
      %28 = dma.hbm_to_vmem [thread:$0]  %s21, 256, %s23, [#allocation3], 128, 128, 8
    $region5: #{tpu_custom_call.1} parent=1 // pred_fallthru
      _
    // Predicated region
    $region6: #{tpu_custom_call.1} parent=1 // pred_check
      _
    $region7: #{tpu_custom_call.1} parent=1 // pred_check_branch
      %30 = sbr.rel (0) target = $region9
    $region8: #{tpu_custom_call.1} parent=1 // pred_region
      %32 = vsyncadd [#allocation6], 0
      %s33 = sshll.u32 %s1, 4
      %s34 = int_to_ptr.hbm [resolvable:$true] %s33
      %s35 = sshll.u32 [#allocation5], 4
      %s36 = int_to_ptr.vmem [resolvable:$true] %s35
      %41 = dma.hbm_to_vmem [thread:$0]  %s34, 1024, %s36, [#allocation6], 64, 64, 4
    $region9: #{tpu_custom_call.1} parent=1 // pred_fallthru
      _
    // Predicated region
    $region10: #{tpu_custom_call.1} parent=1 // pred_check
      _
    $region11: #{tpu_custom_call.1} parent=1 // pred_check_branch
      %43 = sbr.rel (0) target = $region13
    $region12: #{tpu_custom_call.1} parent=1 // pred_region
      %45 = vsyncadd [#allocation6], 0
      %s46 = sshll.u32 %s2, 4
      %s47 = int_to_ptr.hbm [resolvable:$true] %s46
      %s48 = sshll.u32 [#allocation7], 4
      %s49 = int_to_ptr.vmem [resolvable:$true] %s48
      %54 = dma.hbm_to_vmem [thread:$0]  %s47, 1024, %s49, [#allocation6], 64, 64, 4
    $region13: #{tpu_custom_call.1} parent=1 // pred_fallthru
      _
    // Predicated region
    $region14: #{tpu_custom_call.1} parent=1 // pred_check
      _
    $region15: #{tpu_custom_call.1} parent=1 // pred_check_branch
      %56 = sbr.rel (0) target = $region17
    $region16: #{tpu_custom_call.1} parent=1 // pred_region
      _
    $region17: #{tpu_custom_call.1} parent=1 // pred_fallthru
      _
    // Predicated region
    $region18: #{tpu_custom_call.1} parent=1 // pred_check
      _
    $region19: #{tpu_custom_call.1} parent=1 // pred_check_branch
      %58 = sbr.rel (0) target = $region21
    $region20: #{tpu_custom_call.1} parent=1 // pred_region
      _
    $region21: #{tpu_custom_call.1} parent=1 // pred_fallthru
      _
    // Predicated region
    $region22: #{tpu_custom_call.1} parent=1 // pred_check
      _
    $region23: #{tpu_custom_call.1} parent=1 // pred_check_branch
      %60 = sbr.rel (0) target = $region25
    $region24: #{tpu_custom_call.1} parent=1 // pred_region
      %62 = dma.done [#allocation3], 256
    $region25: #{tpu_custom_call.1} parent=1 // pred_fallthru
      _
    // Predicated region
    $region26: #{tpu_custom_call.1} parent=1 // pred_check
      _
    $region27: #{tpu_custom_call.1} parent=1 // pred_check_branch
      %64 = sbr.rel (0) target = $region29
    $region28: #{tpu_custom_call.1} parent=1 // pred_region
      %66 = dma.done [#allocation6], 1024
    $region29: #{tpu_custom_call.1} parent=1 // pred_fallthru
      _
    // Predicated region
    $region30: #{tpu_custom_call.1} parent=1 // pred_check
      _
    $region31: #{tpu_custom_call.1} parent=1 // pred_check_branch
      %68 = sbr.rel (0) target = $region33
    $region32: #{tpu_custom_call.1} parent=1 // pred_region
      %70 = dma.done [#allocation6], 1024
    $region33: #{tpu_custom_call.1} parent=1 // pred_fallthru
      _
    %v71 = vld [vmem:[%s3] sm:$0x3]
    %v72 = vld [vmem:[#allocation2] sm:$0xff]
    %v73 = vld [vmem:[#allocation2 + $0x8] sm:$0xff]
    %v74 = vpack.c.bf16 %v73, %v72
    %v75 = vld [vmem:[#allocation5] sm:$0xf]
    %v76 = vld [vmem:[#allocation5 + $0x4] sm:$0xf]
    %v77 = vld [vmem:[#allocation5 + $0x8] sm:$0xf]
    %v78 = vld [vmem:[#allocation5 + $0xc] sm:$0xf]
    %v79 = vld [vmem:[#allocation5 + $0x10] sm:$0xf]
    %v80 = vld [vmem:[#allocation5 + $0x14] sm:$0xf]
    %v81 = vld [vmem:[#allocation5 + $0x18] sm:$0xf]
    %v82 = vld [vmem:[#allocation5 + $0x1c] sm:$0xf]
    %v83 = vld [vmem:[#allocation5 + $0x20] sm:$0xf]
    %v84 = vld [vmem:[#allocation5 + $0x24] sm:$0xf]
    %v85 = vld [vmem:[#allocation5 + $0x28] sm:$0xf]
    %v86 = vld [vmem:[#allocation5 + $0x2c] sm:$0xf]
    %v87 = vld [vmem:[#allocation5 + $0x30] sm:$0xf]
    %v88 = vld [vmem:[#allocation5 + $0x34] sm:$0xf]
    %v89 = vld [vmem:[#allocation5 + $0x38] sm:$0xf]
    %v90 = vld [vmem:[#allocation5 + $0x3c] sm:$0xf]
    %v91 = vld [vmem:[%s4] sm:$0x1]
    %v93 = vperm.slane %v91, 0
    %v111 = vunpack.c.l.b16 %v75
    %v112 = vunpack.c.l.b16 %v76
    %v113 = vunpack.c.l.b16 %v77
    %v114 = vunpack.c.l.b16 %v78
    %v115 = vunpack.c.l.b16 %v79
    %v116 = vunpack.c.l.b16 %v80
    %v117 = vunpack.c.l.b16 %v81
    %v118 = vunpack.c.l.b16 %v82
    %v119 = vunpack.c.l.b16 %v83
    %v120 = vunpack.c.l.b16 %v84
    %v121 = vunpack.c.l.b16 %v85
    %v122 = vunpack.c.l.b16 %v86
    %v123 = vunpack.c.l.b16 %v87
    %v124 = vunpack.c.l.b16 %v88
    %v125 = vunpack.c.l.b16 %v89
    %v126 = vunpack.c.l.b16 %v90
    %v127 = vpack.c.b16 %v112, %v111
    %v128 = vpack.c.b16 %v114, %v113
    %v129 = vpack.c.b16 %v116, %v115
    %v130 = vpack.c.b16 %v118, %v117
    %v131 = vpack.c.b16 %v120, %v119
    %v132 = vpack.c.b16 %v122, %v121
    %v133 = vpack.c.b16 %v124, %v123
    %v134 = vpack.c.b16 %v126, %v125
    %143 = vmatpush.bf16.msra.mxu0 %v134
    %144 = vmatpush.bf16.msra.mxu0 %v133
    %145 = vmatpush.bf16.msra.mxu0 %v132
    %146 = vmatpush.bf16.msra.mxu0 %v131
    %147 = vmatpush.bf16.msra.mxu0 %v130
    %148 = vmatpush.bf16.msra.mxu0 %v129
    %149 = vmatpush.bf16.msra.mxu0 %v128
    %150 = vmatpush.bf16.msra.mxu0 %v127
    %151 = vmatmul.bf16.gmra.mxu0 %v74
    %v152 = vpop.f32.mrf.mxu0
    %v153 = vadd.f32 %v93, %v152
    %v154 = vpop.f32.mrf.mxu0
    %v155 = vadd.f32 %v93, %v154
    %156 = vdwg.mxu0
    %157 = vmax.xlane.f32.xlu0 %v153
    %v158 = vpop.xlane.xlu0 %157
    %159 = vmax.xlane.f32.xlu0 %v155
    %v160 = vpop.xlane.xlu0 %159
    %vm161 = vcmp.ge.f32.partialorder %v153, %v158
    %vm162 = vcmp.ge.f32.partialorder %v155, %v160
    %v163 = vsel %vm161, -3.4028235e+38, %v153
    %v164 = vsel %vm162, -3.4028235e+38, %v155
    %165 = vmax.xlane.f32.xlu0 %v163
    %v166 = vpop.xlane.xlu0 %165
    %167 = vmax.xlane.f32.xlu0 %v164
    %v168 = vpop.xlane.xlu0 %167
    %vm169 = vcmp.ge.f32.partialorder %v163, %v166
    %vm170 = vcmp.ge.f32.partialorder %v164, %v168
    %v171 = vsel %vm169, -3.4028235e+38, %v163
    %v172 = vsel %vm170, -3.4028235e+38, %v164
    %173 = vmax.xlane.f32.xlu0 %v171
    %v174 = vpop.xlane.xlu0 %173
    %175 = vmax.xlane.f32.xlu0 %v172
    %v176 = vpop.xlane.xlu0 %175
    %vm177 = vcmp.ge.f32.partialorder %v171, %v174
    %vm178 = vcmp.ge.f32.partialorder %v172, %v176
    %v179 = vsel %vm177, -3.4028235e+38, %v171
    %v180 = vsel %vm178, -3.4028235e+38, %v172
    %181 = vmax.xlane.f32.xlu0 %v179
    %v182 = vpop.xlane.xlu0 %181
    %183 = vmax.xlane.f32.xlu0 %v180
    %v184 = vpop.xlane.xlu0 %183
    %vm185 = vcmp.ge.f32.partialorder %v179, %v182
    %vm186 = vcmp.ge.f32.partialorder %v180, %v184
    %v187 = vsel %vm185, -3.4028235e+38, %v179
    %v188 = vsel %vm186, -3.4028235e+38, %v180
    %189 = vmax.xlane.f32.xlu0 %v187
    %v190 = vpop.xlane.xlu0 %189
    %191 = vmax.xlane.f32.xlu0 %v188
    %v192 = vpop.xlane.xlu0 %191
    %vm193 = vcmp.ge.f32.partialorder %v153, %v190
    %vm194 = vcmp.ge.f32.partialorder %v155, %v192
    %v195 = vsel %vm193, %v153, 0.0
    %v196 = vsel %vm194, %v155, 0.0
    %197 = vst [vmem:[#allocation9] sm:$0xff] %v195
    %198 = vst [vmem:[#allocation9 + $0x8] sm:$0xff] %v196
    %v199 = vpack.c.bf16 %v196, %v195
    %v200 = vld [vmem:[#allocation7] sm:$0xf]
    %v201 = vld [vmem:[#allocation7 + $0x4] sm:$0xf]
    %v202 = vld [vmem:[#allocation7 + $0x8] sm:$0xf]
    %v203 = vld [vmem:[#allocation7 + $0xc] sm:$0xf]
    %v204 = vld [vmem:[#allocation7 + $0x10] sm:$0xf]
    %v205 = vld [vmem:[#allocation7 + $0x14] sm:$0xf]
    %v206 = vld [vmem:[#allocation7 + $0x18] sm:$0xf]
    %v207 = vld [vmem:[#allocation7 + $0x1c] sm:$0xf]
    %v208 = vld [vmem:[#allocation7 + $0x20] sm:$0xf]
    %v209 = vld [vmem:[#allocation7 + $0x24] sm:$0xf]
    %v210 = vld [vmem:[#allocation7 + $0x28] sm:$0xf]
    %v211 = vld [vmem:[#allocation7 + $0x2c] sm:$0xf]
    %v212 = vld [vmem:[#allocation7 + $0x30] sm:$0xf]
    %v213 = vld [vmem:[#allocation7 + $0x34] sm:$0xf]
    %v214 = vld [vmem:[#allocation7 + $0x38] sm:$0xf]
    %v215 = vld [vmem:[#allocation7 + $0x3c] sm:$0xf]
    %v216 = vperm.slane %v71, 0
    %v233 = vunpack.c.l.b16 %v200
    %v234 = vunpack.c.l.b16 %v201
    %v235 = vunpack.c.l.b16 %v202
    %v236 = vunpack.c.l.b16 %v203
    %v237 = vunpack.c.l.b16 %v204
    %v238 = vunpack.c.l.b16 %v205
    %v239 = vunpack.c.l.b16 %v206
    %v240 = vunpack.c.l.b16 %v207
    %v241 = vunpack.c.l.b16 %v208
    %v242 = vunpack.c.l.b16 %v209
    %v243 = vunpack.c.l.b16 %v210
    %v244 = vunpack.c.l.b16 %v211
    %v245 = vunpack.c.l.b16 %v212
    %v246 = vunpack.c.l.b16 %v213
    %v247 = vunpack.c.l.b16 %v214
    %v248 = vunpack.c.l.b16 %v215
    %v249 = vpack.c.b16 %v234, %v233
    %v250 = vpack.c.b16 %v236, %v235
    %v251 = vpack.c.b16 %v238, %v237
    %v252 = vpack.c.b16 %v240, %v239
    %v253 = vpack.c.b16 %v242, %v241
    %v254 = vpack.c.b16 %v244, %v243
    %v255 = vpack.c.b16 %v246, %v245
    %v256 = vpack.c.b16 %v248, %v247
    %265 = vmatpush.bf16.msra.mxu0 %v256
    %266 = vmatpush.bf16.msra.mxu0 %v255
    %267 = vmatpush.bf16.msra.mxu0 %v254
    %268 = vmatpush.bf16.msra.mxu0 %v253
    %269 = vmatpush.bf16.msra.mxu0 %v252
    %270 = vmatpush.bf16.msra.mxu0 %v251
    %271 = vmatpush.bf16.msra.mxu0 %v250
    %272 = vmatpush.bf16.msra.mxu0 %v249
    %273 = vmatmul.bf16.gmra.mxu0 %v199
    %v274 = vpop.f32.mrf.mxu0
    %v275 = vadd.f32 %v216, %v274
    %v276 = vpop.f32.mrf.mxu0
    %v277 = vadd.f32 %v216, %v276
    %278 = vdwg.mxu0
    %v279 = vperm.slane %v71, 1
    %v280 = vmul.f32 %v279, %v72
    %v281 = vmul.f32 %v279, %v73
    %v282 = vadd.f32 %v275, %v280
    %v283 = vadd.f32 %v277, %v281
    %284 = vst [vmem:[#allocation8] sm:$0xff] %v282
    %285 = vst [vmem:[#allocation8 + $0x8] sm:$0xff] %v283
    // Predicated region
    $region34: #{tpu_custom_call.1} parent=1 // pred_check
      _
    $region35: #{tpu_custom_call.1} parent=1 // pred_check_branch
      %287 = sbr.rel (0) target = $region37
    $region36: #{tpu_custom_call.1} parent=1 // pred_region
      %289 = vsyncadd [#allocation4], 0
      %s290 = sshll.u32 [#allocation8], 4
      %s291 = int_to_ptr.vmem [resolvable:$true] %s290
      %s292 = sshll.u32 %s5, 4
      %s293 = int_to_ptr.hbm [resolvable:$true] %s292
      %298 = dma.vmem_to_hbm [thread:$0]  %s291, 256, %s293, [#allocation4], 128, 128, 8
    $region37: #{tpu_custom_call.1} parent=1 // pred_fallthru
      _
    // Predicated region
    $region38: #{tpu_custom_call.1} parent=1 // pred_check
      _
    $region39: #{tpu_custom_call.1} parent=1 // pred_check_branch
      %300 = sbr.rel (0) target = $region41
    $region40: #{tpu_custom_call.1} parent=1 // pred_region
      %302 = vsyncadd [#allocation10], 0
      %s303 = sshll.u32 [#allocation9], 4
      %s304 = int_to_ptr.vmem [resolvable:$true] %s303
      %s305 = sshll.u32 %s6, 4
      %s306 = int_to_ptr.hbm [resolvable:$true] %s305
      %311 = dma.vmem_to_hbm [thread:$0]  %s304, 256, %s306, [#allocation10], 128, 128, 8
    $region41: #{tpu_custom_call.1} parent=1 // pred_fallthru
      _
    // Predicated region
    $region42: #{tpu_custom_call.1} parent=1 // pred_check
      _
    $region43: #{tpu_custom_call.1} parent=1 // pred_check_branch
      %313 = sbr.rel (0) target = $region45
    $region44: #{tpu_custom_call.1} parent=1 // pred_region
      %315 = dma.done [#allocation4], 256
    $region45: #{tpu_custom_call.1} parent=1 // pred_fallthru
      _
    // Predicated region
    $region46: #{tpu_custom_call.1} parent=1 // pred_check
      _
    $region47: #{tpu_custom_call.1} parent=1 // pred_check_branch
      %317 = sbr.rel (0) target = $region49
    $region48: #{tpu_custom_call.1} parent=1 // pred_region
      %319 = dma.done [#allocation10], 256
    $region49: #{tpu_custom_call.1} parent=1 // pred_fallthru
      _
    %320 = vsyncpa [#allocation3], 1
    %321 = vsyncpa [#allocation6], 1
    %322 = vsyncpa [#allocation4], 1
    %323 = vsyncpa [#allocation10], 1

</llo_original>
